<compile_context>
chip_gen: v7x
topology: tpu7x:2x2x1
jax: 0.10.0
libtpu: 0.0.40
codegen_flags: <defaults>
</compile_context>

<pallas_src>
from functools import partial

import jax
import jax.numpy as jnp
from jax.experimental import pallas as pl
from jax.experimental.pallas import tpu as pltpu

IN_FEATURES = 1
OUT_FEATURES = 16
LATENT_DIM = 3
HIDDEN_DIM = 32
N_EIG = 2
N_HARMONICS = 1
COEFFS_SIZE = (IN_FEATURES + 1) * OUT_FEATURES * N_HARMONICS * N_EIG   # 64
W_COLS = (IN_FEATURES + 1) * OUT_FEATURES                              # 32 (== HIDDEN_DIM here)
FEATS = IN_FEATURES + 1 + LATENT_DIM                                   # 5

# Packed-parameter lane layout (transposed weights, 32 sublane rows, one
# 128-lane tile).  W_COLS == HIDDEN_DIM == 32, so the W2^T blocks (rows = coeff
# index) and the W1^T/b1 columns (rows = hidden index) share the same 32 rows.
_COL_W2E = 0                         # lanes  0:32  -> w2[:, 0::2].T  (cos / eig 0)
_COL_W2O = HIDDEN_DIM                # lanes 32:64  -> w2[:, 1::2].T  (sin / eig 1)
_COL_W1 = 2 * HIDDEN_DIM             # lanes 64:67  -> w1.T (3 columns)
_COL_B1 = _COL_W1 + LATENT_DIM       # lane  67     -> b1
_COL_B2E = _COL_B1 + 1               # lane  68     -> b2[:, 0::2]
_COL_B2O = _COL_B2E + 1              # lane  69     -> b2[:, 1::2]
PACK_ROWS = 32
PACK_LANES = 128                     # one full lane tile -> single dense DMA (16 KiB)


def pack_params(w1, b1, w2, b2):
    """Host-side one-time re-layout of the static decoder weights into a single
    lane-tile-wide (32, 128) block, pre-transposed for the lane-dense kernel."""
    p = jnp.zeros((PACK_ROWS, PACK_LANES), jnp.float32)
    p = p.at[:W_COLS, _COL_W2E:_COL_W2E + HIDDEN_DIM].set(w2[:, 0::2].T)   # (32,32)
    p = p.at[:W_COLS, _COL_W2O:_COL_W2O + HIDDEN_DIM].set(w2[:, 1::2].T)   # (32,32)
    p = p.at[:HIDDEN_DIM, _COL_W1:_COL_W1 + LATENT_DIM].set(w1.T)          # (32,3)
    p = p.at[:HIDDEN_DIM, _COL_B1].set(b1[0])
    p = p.at[:W_COLS, _COL_B2E].set(b2[0, 0::2])
    p = p.at[:W_COLS, _COL_B2O].set(b2[0, 1::2])
    return p


def wag_kernel(scal_ref, xt_ref, p_ref, o_ref):
    # ---- Bin scalars from SMEM ([s, d1..d4, sh1..sh4]); trig on the EUP ----
    s_v = jnp.full((1, 1), scal_ref[0], dtype=jnp.float32)
    c11 = (jnp.cos(s_v * scal_ref[1] + scal_ref[5])          # Bin[0,0]
           + jnp.cos(s_v * scal_ref[3] + scal_ref[7]))       # Bin[0,2]
    sn11 = (jnp.sin(s_v * scal_ref[2] + scal_ref[6])         # Bin[1,1]
            + jnp.sin(s_v * scal_ref[4] + scal_ref[8]))      # Bin[1,3]

    # ---- fold Bin scalars into fc2 -> one scaled weight + bias (VPU) -------
    w_scaled = (p_ref[:, _COL_W2E:_COL_W2E + HIDDEN_DIM] * c11
                + p_ref[:, _COL_W2O:_COL_W2O + HIDDEN_DIM] * sn11)      # (32, 32)
    b_scaled = (p_ref[:, _COL_B2E:_COL_B2E + 1] * c11
                + p_ref[:, _COL_B2O:_COL_B2O + 1] * sn11)               # (32, 1)

    # ---- fc1 as three outer-product FMAs on the VPU (K=3; MXU pointless) ---
    xt = xt_ref[...]                                        # (FEATS, BLOCK_B)
    l0 = xt[IN_FEATURES + 1:IN_FEATURES + 2, :]             # latent rows (1, BLOCK_B)
    l1 = xt[IN_FEATURES + 2:IN_FEATURES + 3, :]
    l2 = xt[IN_FEATURES + 3:IN_FEATURES + 4, :]
    h_t = jnp.tanh(p_ref[:, _COL_B1:_COL_B1 + 1]
                   + p_ref[:, _COL_W1 + 0:_COL_W1 + 1] * l0
                   + p_ref[:, _COL_W1 + 1:_COL_W1 + 2] * l1
                   + p_ref[:, _COL_W1 + 2:_COL_W1 + 3] * l2)            # (32, BLOCK_B)

    # ---- single MXU matmul + per-sample affine ------------------------------
    w_t = jnp.dot(w_scaled, h_t, preferred_element_type=jnp.float32) + b_scaled
    inp = xt[0:IN_FEATURES, :]                              # (1, BLOCK_B)
    o_ref[...] = inp * w_t[:OUT_FEATURES, :] + w_t[OUT_FEATURES:, :]    # (16, BLOCK_B)


@partial(jax.jit, static_argnames=("block_b",))
def wag_forward(x, params_packed, ds, *, block_b=256):
    batch = x.shape[0]
    assert batch % block_b == 0 and block_b % 128 == 0, "batch must be k*block_b, block_b % 128 == 0"
    n_blocks = batch // block_b
    # s = time value of the GLOBAL last row (module semantics).  Computed once
    # here so the per-block grid cannot silently change which row is "last".
    scal = jnp.concatenate([x[-1, IN_FEATURES][None], ds]).astype(jnp.float32)  # (9,)
    x_t = x.T                                    # (FEATS, batch) — layout plumbing only
    out_t = pl.pallas_call(
        wag_kernel,
        out_shape=jax.ShapeDtypeStruct((OUT_FEATURES, batch), jnp.float32),
        grid_spec=pltpu.PrefetchScalarGridSpec(
            num_scalar_prefetch=1,                       # scal -> SMEM
            grid=(n_blocks,),
            in_specs=[
                pl.BlockSpec((FEATS, block_b), lambda i, _scal: (0, i)),        # x^T blocks
                pl.BlockSpec((PACK_ROWS, PACK_LANES), lambda i, _scal: (0, 0)), # params resident
            ],
            out_specs=pl.BlockSpec((OUT_FEATURES, block_b), lambda i, _scal: (0, i)),
        ),
        compiler_params=pltpu.CompilerParams(
            dimension_semantics=("parallel",)),          # shards blocks over v7x's 2 TCs
    )(scal, x_t, params_packed)
    return out_t.T                                       # (batch, 16)


def wag_reference(x, w1, b1, w2, b2, ds):
    """Plain-JAX transcription of the PyTorch forward (aew=True, merger=False),
    using the ORIGINAL (un-permuted) weight layout."""
    batch = x.shape[0]
    latent = x[:, -LATENT_DIM:]
    h = jnp.tanh(latent @ w1 + b1)
    coeffs = (h @ w2 + b2).reshape(batch, W_COLS, N_EIG * N_HARMONICS)
    s = x[-1, IN_FEATURES]
    d, sh = ds[:4], ds[4:]
    Bin = jnp.zeros((2, 4), jnp.float32)
    Bin = Bin.at[0, 0].set(jnp.cos(s * d[0] + sh[0]))
    Bin = Bin.at[1, 1].set(jnp.sin(s * d[1] + sh[1]))
    Bin = Bin.at[0, 2].set(jnp.cos(s * d[2] + sh[2]))
    Bin = Bin.at[1, 3].set(jnp.sin(s * d[3] + sh[3]))
    w = (coeffs @ Bin).sum(2)
    weight = w[:, :IN_FEATURES * OUT_FEATURES].reshape(batch, IN_FEATURES, OUT_FEATURES)
    bias = w[:, IN_FEATURES * OUT_FEATURES:]
    weighted = jnp.squeeze(
        jnp.einsum('bij,bjk->bik', x[:, :IN_FEATURES, None], weight), axis=1)
    return weighted + bias


if __name__ == "__main__":
    key = jax.random.PRNGKey(0)
    k1, k2, k3, k4, kd, kx = jax.random.split(key, 6)

    # PyTorch nn.Linear default init U(-1/sqrt(fan_in), +1/sqrt(fan_in)).
    bound1 = 1.0 / (LATENT_DIM ** 0.5)
    w1 = jax.random.uniform(k1, (LATENT_DIM, HIDDEN_DIM), jnp.float32, -bound1, bound1)
    b1 = jax.random.uniform(k2, (1, HIDDEN_DIM), jnp.float32, -bound1, bound1)
    bound2 = 1.0 / (HIDDEN_DIM ** 0.5)
    w2 = jax.random.uniform(k3, (HIDDEN_DIM, COEFFS_SIZE), jnp.float32, -bound2, bound2)
    b2 = jax.random.uniform(k4, (1, COEFFS_SIZE), jnp.float32, -bound2, bound2)

    # dilation1..4 init 1.0, shift1..4 init 0.0; perturb slightly (trainable
    # parameters) so the cos/sin combination is fully exercised.
    pert = 0.1 * jax.random.uniform(kd, (8,), jnp.float32)
    ds = jnp.concatenate([jnp.ones((4,), jnp.float32), jnp.zeros((4,), jnp.float32)]) + pert

    # Batched over many samples to amortize launch/DMA-setup overhead
    # (the module's batch dimension is free; s is still the global last row).
    BATCH = 1024
    x = jax.random.normal(kx, (BATCH, FEATS), jnp.float32)

    params_packed = pack_params(w1, b1, w2, b2)   # one-time host-side re-layout

    out = jax.block_until_ready(wag_forward(x, params_packed, ds, block_b=256))
    ref = wag_reference(x, w1, b1, w2, b2, ds)

    assert out.shape == (BATCH, OUT_FEATURES)
    assert jnp.allclose(out, ref, atol=1e-3, rtol=1e-3), "kernel/reference mismatch"

    print("KERNEL_OK")
</pallas_src>

<mosaic_0001>
module attributes {stable_mosaic.version = 11 : i64} {
  func.func @wag_kernel(%arg0: i32, %arg1: memref<9xf32, #tpu.memory_space<smem>>, %arg2: memref<5x256xf32, #tpu.memory_space<vmem>>, %arg3: memref<32x128xf32, #tpu.memory_space<vmem>>, %arg4: memref<16x256xf32, #tpu.memory_space<vmem>>) attributes {dimension_semantics = [#tpu.dimension_semantics<parallel>], iteration_bounds = array<i64: 4>, scalar_prefetch = 1 : i64, scratch_operands = 0 : i64, tpu.core_type = #tpu.core_type<tc>, window_params = [{transform_indices = @transform_0, window_bounds = array<i64: 5, 256>}, {pipeline_mode = #tpu.pipeline_mode<synchronous>, transform_indices = @transform_1, window_bounds = array<i64: 32, 128>}, {transform_indices = @transform_2, window_bounds = array<i64: 16, 256>}]} {
    %c0 = arith.constant 0 : index
    %0 = memref.load %arg1[%c0] : memref<9xf32, #tpu.memory_space<smem>>
    %1 = vector.broadcast %0 : f32 to vector<1x1xf32>
    %c1 = arith.constant 1 : index
    %2 = memref.load %arg1[%c1] : memref<9xf32, #tpu.memory_space<smem>>
    %3 = vector.broadcast %2 : f32 to vector<1x1xf32>
    %4 = arith.mulf %1, %3 : vector<1x1xf32>
    %c5 = arith.constant 5 : index
    %5 = memref.load %arg1[%c5] : memref<9xf32, #tpu.memory_space<smem>>
    %6 = vector.broadcast %5 : f32 to vector<1x1xf32>
    %7 = arith.addf %4, %6 : vector<1x1xf32>
    %8 = math.cos %7 : vector<1x1xf32>
    %c3 = arith.constant 3 : index
    %9 = memref.load %arg1[%c3] : memref<9xf32, #tpu.memory_space<smem>>
    %10 = vector.broadcast %9 : f32 to vector<1x1xf32>
    %11 = arith.mulf %1, %10 : vector<1x1xf32>
    %c7 = arith.constant 7 : index
    %12 = memref.load %arg1[%c7] : memref<9xf32, #tpu.memory_space<smem>>
    %13 = vector.broadcast %12 : f32 to vector<1x1xf32>
    %14 = arith.addf %11, %13 : vector<1x1xf32>
    %15 = math.cos %14 : vector<1x1xf32>
    %16 = arith.addf %8, %15 : vector<1x1xf32>
    %c2 = arith.constant 2 : index
    %17 = memref.load %arg1[%c2] : memref<9xf32, #tpu.memory_space<smem>>
    %18 = vector.broadcast %17 : f32 to vector<1x1xf32>
    %19 = arith.mulf %1, %18 : vector<1x1xf32>
    %c6 = arith.constant 6 : index
    %20 = memref.load %arg1[%c6] : memref<9xf32, #tpu.memory_space<smem>>
    %21 = vector.broadcast %20 : f32 to vector<1x1xf32>
    %22 = arith.addf %19, %21 : vector<1x1xf32>
    %23 = math.sin %22 : vector<1x1xf32>
    %c4 = arith.constant 4 : index
    %24 = memref.load %arg1[%c4] : memref<9xf32, #tpu.memory_space<smem>>
    %25 = vector.broadcast %24 : f32 to vector<1x1xf32>
    %26 = arith.mulf %1, %25 : vector<1x1xf32>
    %c8 = arith.constant 8 : index
    %27 = memref.load %arg1[%c8] : memref<9xf32, #tpu.memory_space<smem>>
    %28 = vector.broadcast %27 : f32 to vector<1x1xf32>
    %29 = arith.addf %26, %28 : vector<1x1xf32>
    %30 = math.sin %29 : vector<1x1xf32>
    %31 = arith.addf %23, %30 : vector<1x1xf32>
    %c0_0 = arith.constant 0 : index
    %c0_1 = arith.constant 0 : index
    %32 = vector.load %arg3[%c0_0, %c0_1] : memref<32x128xf32, #tpu.memory_space<vmem>>, vector<32x32xf32>
    %33 = vector.broadcast %16 : vector<1x1xf32> to vector<32x32xf32>
    %34 = arith.mulf %32, %33 : vector<32x32xf32>
    %c0_2 = arith.constant 0 : index
    %c32 = arith.constant 32 : index
    %35 = vector.load %arg3[%c0_2, %c32] : memref<32x128xf32, #tpu.memory_space<vmem>>, vector<32x32xf32>
    %36 = vector.broadcast %31 : vector<1x1xf32> to vector<32x32xf32>
    %37 = arith.mulf %35, %36 : vector<32x32xf32>
    %38 = arith.addf %34, %37 : vector<32x32xf32>
    %c0_3 = arith.constant 0 : index
    %c68 = arith.constant 68 : index
    %39 = vector.load %arg3[%c0_3, %c68] : memref<32x128xf32, #tpu.memory_space<vmem>>, vector<32x1xf32>
    %40 = vector.broadcast %16 : vector<1x1xf32> to vector<32x1xf32>
    %41 = arith.mulf %39, %40 : vector<32x1xf32>
    %c0_4 = arith.constant 0 : index
    %c69 = arith.constant 69 : index
    %42 = vector.load %arg3[%c0_4, %c69] : memref<32x128xf32, #tpu.memory_space<vmem>>, vector<32x1xf32>
    %43 = vector.broadcast %31 : vector<1x1xf32> to vector<32x1xf32>
    %44 = arith.mulf %42, %43 : vector<32x1xf32>
    %45 = arith.addf %41, %44 : vector<32x1xf32>
    %c0_5 = arith.constant 0 : index
    %c0_6 = arith.constant 0 : index
    %46 = vector.load %arg2[%c0_5, %c0_6] : memref<5x256xf32, #tpu.memory_space<vmem>>, vector<5x256xf32>
    %47 = vector.extract_strided_slice %46 {offsets = [2, 0], sizes = [1, 256], strides = [1, 1]} : vector<5x256xf32> to vector<1x256xf32>
    %48 = vector.extract_strided_slice %46 {offsets = [3, 0], sizes = [1, 256], strides = [1, 1]} : vector<5x256xf32> to vector<1x256xf32>
    %49 = vector.extract_strided_slice %46 {offsets = [4, 0], sizes = [1, 256], strides = [1, 1]} : vector<5x256xf32> to vector<1x256xf32>
    %c0_7 = arith.constant 0 : index
    %c67 = arith.constant 67 : index
    %50 = vector.load %arg3[%c0_7, %c67] : memref<32x128xf32, #tpu.memory_space<vmem>>, vector<32x1xf32>
    %c0_8 = arith.constant 0 : index
    %c64 = arith.constant 64 : index
    %51 = vector.load %arg3[%c0_8, %c64] : memref<32x128xf32, #tpu.memory_space<vmem>>, vector<32x1xf32>
    %52 = vector.broadcast %51 : vector<32x1xf32> to vector<32x256xf32>
    %53 = vector.broadcast %47 : vector<1x256xf32> to vector<32x256xf32>
    %54 = arith.mulf %52, %53 : vector<32x256xf32>
    %55 = vector.broadcast %50 : vector<32x1xf32> to vector<32x256xf32>
    %56 = arith.addf %55, %54 : vector<32x256xf32>
    %c0_9 = arith.constant 0 : index
    %c65 = arith.constant 65 : index
    %57 = vector.load %arg3[%c0_9, %c65] : memref<32x128xf32, #tpu.memory_space<vmem>>, vector<32x1xf32>
    %58 = vector.broadcast %57 : vector<32x1xf32> to vector<32x256xf32>
    %59 = vector.broadcast %48 : vector<1x256xf32> to vector<32x256xf32>
    %60 = arith.mulf %58, %59 : vector<32x256xf32>
    %61 = arith.addf %56, %60 : vector<32x256xf32>
    %c0_10 = arith.constant 0 : index
    %c66 = arith.constant 66 : index
    %62 = vector.load %arg3[%c0_10, %c66] : memref<32x128xf32, #tpu.memory_space<vmem>>, vector<32x1xf32>
    %63 = vector.broadcast %62 : vector<32x1xf32> to vector<32x256xf32>
    %64 = vector.broadcast %49 : vector<1x256xf32> to vector<32x256xf32>
    %65 = arith.mulf %63, %64 : vector<32x256xf32>
    %66 = arith.addf %61, %65 : vector<32x256xf32>
    %67 = math.tanh %66 : vector<32x256xf32>
    %cst = arith.constant dense<0.000000e+00> : vector<32x256xf32>
    %68 = tpu.matmul %38, %67, %cst {dimension_numbers = #tpu.dot_dimension_numbers<[1], [0], [0], [1], [0, 0, 1, 1], [], []>} : vector<32x32xf32>, vector<32x256xf32>, vector<32x256xf32> -> vector<32x256xf32>
    %69 = vector.broadcast %45 : vector<32x1xf32> to vector<32x256xf32>
    %70 = arith.addf %68, %69 : vector<32x256xf32>
    %71 = vector.extract_strided_slice %46 {offsets = [0, 0], sizes = [1, 256], strides = [1, 1]} : vector<5x256xf32> to vector<1x256xf32>
    %72 = vector.extract_strided_slice %70 {offsets = [0, 0], sizes = [16, 256], strides = [1, 1]} : vector<32x256xf32> to vector<16x256xf32>
    %73 = vector.broadcast %71 : vector<1x256xf32> to vector<16x256xf32>
    %74 = arith.mulf %73, %72 : vector<16x256xf32>
    %75 = vector.extract_strided_slice %70 {offsets = [16, 0], sizes = [16, 256], strides = [1, 1]} : vector<32x256xf32> to vector<16x256xf32>
    %76 = arith.addf %74, %75 : vector<16x256xf32>
    %c0_11 = arith.constant 0 : index
    %c0_12 = arith.constant 0 : index
    %77 = vector.load %arg4[%c0_11, %c0_12] : memref<16x256xf32, #tpu.memory_space<vmem>>, vector<16x256xf32>
    tpu.vector_store %arg4[%c0_11, %c0_12], %76 {strides = array<i32>} : memref<16x256xf32, #tpu.memory_space<vmem>>, vector<16x256xf32>,
    return
  }
  func.func @transform_0(%arg0: i32, %arg1: memref<9xf32, #tpu.memory_space<smem>>) -> (i32, i32) {
    %c0_i32 = arith.constant 0 : i32
    %c0_i32_0 = arith.constant 0 : i32
    return %c0_i32, %arg0 : i32, i32
  }
  func.func @transform_1(%arg0: i32, %arg1: memref<9xf32, #tpu.memory_space<smem>>) -> (i32, i32) {
    %c0_i32 = arith.constant 0 : i32
    %c0_i32_0 = arith.constant 0 : i32
    %c0_i32_1 = arith.constant 0 : i32
    return %c0_i32, %c0_i32_0 : i32, i32
  }
  func.func @transform_2(%arg0: i32, %arg1: memref<9xf32, #tpu.memory_space<smem>>) -> (i32, i32) {
    %c0_i32 = arith.constant 0 : i32
    %c0_i32_0 = arith.constant 0 : i32
    return %c0_i32, %arg0 : i32, i32
  }
}

</mosaic_0001>

<llo_original>
// kernel: wag_forward.1
$region0: #{wag_forward.1}
  #allocation0 [shape = 'u32[]', space=smem, size = 0x4, offset = 0x4, fixed_abs, tag = 'smem constant byte address 0x4 - core index']
  #allocation1 [shape = 'u32[144,128]{1,0:T(1,128)}', space=vmem, size = 0x12000, scoped, tag = 'internal scratch']
  #allocation2 [shape = 's32[1]{0}', space=sflag, size = 0x4, scoped, tag = 'scoped memory for wag_forward.1']
  #allocation3 [shape = 'u8[512]{0}', space=smem, size = 0x200, scoped, tag = 'prefetched SMEM operand 0']
  %s0 = inlined_call_operand.vmem [shape: f32[9], index: 0, kind: input, shape index: {}]
  %s1 = inlined_call_operand.hbm [shape: f32[5,1024], index: 1, kind: input, shape index: {}]
  %s2 = inlined_call_operand.hbm [shape: f32[32,128], index: 2, kind: input, shape index: {}]
  %s3 = inlined_call_operand.hbm [shape: f32[16,1024], index: 3, kind: output, shape index: {}]
  %s4 = sld [smem:[#allocation0]]
  $region49: #{wag_forward.1} parent=0
    _
  %s6 = ssub.s32 1, %s4
  %s7 = scalar_select 0, %s6, %s4
  %s8 = sshll.u32 %s0, 4
  %s9 = int_to_ptr.vmem [resolvable:$true] %s8
  %11 = dma.vmem_to_smem %s9, 16, [#allocation3], [#allocation2]
  %12 = dma.done [#allocation2], 16
  %13 = sfence
  $region1: #{wag_forward.1} parent=0
    #allocation4 [shape = 'u8[16384]{0}', space=vmem, size = 0x4000, scoped, tag = 'input window, operand 1']
    #allocation5 [shape = 's32[2]{0}', space=sflag, size = 0x8, scoped, tag = 'scoped memory for wag_forward.1']
    #allocation6 [shape = 's32[2]{0}', space=sflag, size = 0x8, scoped, tag = 'scoped memory for wag_forward.1']
    #allocation7 [shape = 'u8[16384]{0}', space=vmem, size = 0x4000, scoped, tag = 'input window, operand 2, single buffered']
    #allocation8 [shape = 's32[1]{0}', space=sflag, size = 0x4, scoped, tag = 'scoped memory for wag_forward.1']
    #allocation9 [shape = 'u8[32768]{0}', space=vmem, size = 0x8000, scoped, tag = 'output window, operand 0']
    %14 = vsyncpa [#allocation5], 0
    %s15 = scalar_lea.sflag [#allocation5], 1
    %16 = vsyncpa %s15, 0
    %17 = vsyncpa [#allocation8], 0
    %18 = vsyncpa [#allocation6], 0
    %s19 = scalar_lea.sflag [#allocation6], 1
    %20 = vsyncpa %s19, 0
    loop: start=0, step=1, limit=6
    $region2: #{wag_forward.1} parent=1 // loop_pre_header
      _
    $region3: #{wag_forward.1} parent=1 // loop_header
      %s22 = sphi 0, %s26
      %p23 = scmp.ge.s32.totalorder %s22, 6
      %s32 = sphi 0, %s34
      %s35 = sphi 0, %s32
      %s36 = sphi 0, %s35
      %s52 = sphi 0, %s36
      %s56 = sphi 0, %s56
      %s58 = sphi 0, %s56
      %s59 = sphi 0, %s58
      %s73 = sphi 0, %s59
      %s79 = sphi 0, %s81
      %s82 = sphi 0, %s79
      %s83 = sphi 0, %s82
      %s99 = sphi 0, %s83
    $region4: #{wag_forward.1} parent=1 // loop_header_branch
      %25 = sbr.rel (%p23) target = $region8
    $region5: #{wag_forward.1} parent=1 // loop_body
      %s27 = ssub.s32 %s22, 1
      %s28 = ssub.s32 %s22, 2
      %s29 = sadd.s32 %s22, 1
      %s30 = ssub.s32 %s22, %s29
      %p31 = scmp.eq.s32.totalorder %s30, 0
      %s33 = sadd.s32 %s32, 1
      %s34 = scalar_select %p31, %s32, %s33
      %p37 = pneg %p31
      %p38 = scmp.eq.s32.totalorder %s22, 3
      %p39 = por %p37, %p38
      %p40 = scmp.ne.s32.totalorder %s32, %s35
      %p41 = scmp.eq.s32.totalorder %s22, 0
      %p42 = por %p40, %p41
      %p43 = scmp.ne.s32.totalorder %s32, %s35
      %p44 = scmp.eq.s32.totalorder %s27, 3
      %p45 = por %p43, %p44
      %p46 = scmp.ne.s32.totalorder %s35, %s36
      %p47 = scmp.eq.s32.totalorder %s27, 0
      %p48 = por %p46, %p47
      %p49 = scmp.ne.s32.totalorder %s35, %s36
      %p50 = scmp.eq.s32.totalorder %s28, 3
      %p51 = por %p49, %p50
      %p53 = scmp.ne.s32.totalorder %s36, %s52
      %p54 = scmp.eq.s32.totalorder %s28, 0
      %p55 = por %p53, %p54
      %s57 = sadd.s32 %s56, 1
      %p60 = scmp.eq.s32.totalorder %s22, 3
      %p61 = scmp.ne.s32.totalorder %s56, %s58
      %p62 = scmp.eq.s32.totalorder %s22, 0
      %p63 = por %p61, %p62
      %p64 = scmp.ne.s32.totalorder %s56, %s58
      %p65 = scmp.eq.s32.totalorder %s27, 3
      %p66 = por %p64, %p65
      %p67 = scmp.ne.s32.totalorder %s58, %s59
      %p68 = scmp.eq.s32.totalorder %s27, 0
      %p69 = por %p67, %p68
      %p70 = scmp.ne.s32.totalorder %s58, %s59
      %p71 = scmp.eq.s32.totalorder %s28, 3
      %p72 = por %p70, %p71
      %p74 = scmp.ne.s32.totalorder %s59, %s73
      %p75 = scmp.eq.s32.totalorder %s28, 0
      %p76 = por %p74, %p75
      %s77 = ssub.s32 %s22, %s29
      %p78 = scmp.eq.s32.totalorder %s77, 0
      %s80 = sadd.s32 %s79, 1
      %s81 = scalar_select %p78, %s79, %s80
      %p84 = pneg %p78
      %p85 = scmp.eq.s32.totalorder %s22, 3
      %p86 = por %p84, %p85
      %p87 = scmp.ne.s32.totalorder %s79, %s82
      %p88 = scmp.eq.s32.totalorder %s22, 0
      %p89 = por %p87, %p88
      %p90 = scmp.ne.s32.totalorder %s79, %s82
      %p91 = scmp.eq.s32.totalorder %s27, 3
      %p92 = por %p90, %p91
      %p93 = scmp.ne.s32.totalorder %s82, %s83
      %p94 = scmp.eq.s32.totalorder %s27, 0
      %p95 = por %p93, %p94
      %p96 = scmp.ne.s32.totalorder %s82, %s83
      %p97 = scmp.eq.s32.totalorder %s28, 3
      %p98 = por %p96, %p97
      %p100 = scmp.ne.s32.totalorder %s83, %s99
      %p101 = scmp.eq.s32.totalorder %s28, 0
      %p102 = por %p100, %p101
      %p103 = scmp.le.s32.totalorder 1, %s22
      %p104 = scmp.lt.s32.totalorder %s22, 5
      %p105 = pnand %p103, %p104
      %p106 = pneg %p105
      // Predicated region
      $region9: #{wag_forward.1} parent=5 // pred_check
        _
      $region10: #{wag_forward.1} parent=5 // pred_check_branch
        %108 = sbr.rel (%p105) target = $region12
      $region11: #{wag_forward.1} parent=5 // pred_region
        %s109 = ssub.s32 %s22, 1
        // Predicated region
        $region13: #{wag_forward.1} parent=11 // pred_check
          %p110 = pneg %p69
        $region14: #{wag_forward.1} parent=11 // pred_check_branch
          %112 = sbr.rel (%p110) target = $region16
        $region15: #{wag_forward.1} parent=11 // pred_region
          %s114 = ssub.s32 512, 512
          %115 = vsyncadd [#allocation8], %s114
          %s116 = sshll.u32 [#allocation7], 4
          %s117 = int_to_ptr.vmem [resolvable:$true] %s116
          %122 = dma.hbm_to_vmem [thread:$0]  %s2, 512, %s117, [#allocation8], 128, 128, 8
        $region16: #{wag_forward.1} parent=11 // pred_fallthru
          _
      $region12: #{wag_forward.1} parent=5 // pred_fallthru
        _
      %p123 = scmp.lt.s32.totalorder %s22, 4
      // Predicated region
      $region17: #{wag_forward.1} parent=5 // pred_check
        %p124 = pneg %p123
      $region18: #{wag_forward.1} parent=5 // pred_check_branch
        %126 = sbr.rel (%p124) target = $region20
      $region19: #{wag_forward.1} parent=5 // pred_region
        // Predicated region
        $region21: #{wag_forward.1} parent=19 // pred_check
          %p127 = pneg %p42
        $region22: #{wag_forward.1} parent=19 // pred_check_branch
          %129 = sbr.rel (%p127) target = $region24
        $region23: #{wag_forward.1} parent=19 // pred_region
          %s130 = sand.u32 %s32, 1
          %s131 = scalar_lea.sflag [#allocation5], %s130
          %s132 = sand.u32 %s32, 1
          %s133 = smul.addr %s132, 16
          %s134 = scalar_lea.vmem [#allocation4], %s133
          %s135 = smul.u32 2, %s22
          %s137 = ssub.s32 256, 256
          %138 = vsyncadd %s131, %s137
          %s139 = smul.addr %s135, 128
          %s140 = scalar_lea.hbm %s1, %s139
          %s142 = sshll.u32 %s134, 4
          %s143 = int_to_ptr.vmem [resolvable:$true] %s142
          %145 = dma.hbm_to_vmem [thread:$0]  %s140, 256, %s143, %s131
        $region24: #{wag_forward.1} parent=19 // pred_fallthru
          _
      $region20: #{wag_forward.1} parent=5 // pred_fallthru
        _
      %p146 = scmp.le.s32.totalorder 1, %s22
      %p147 = scmp.lt.s32.totalorder %s22, 5
      %p148 = pnand %p146, %p147
      %p149 = pneg %p148
      // Predicated region
      $region25: #{wag_forward.1} parent=5 // pred_check
        _
      $region26: #{wag_forward.1} parent=5 // pred_check_branch
        %151 = sbr.rel (%p148) target = $region28
      $region27: #{wag_forward.1} parent=5 // pred_region
        %s152 = ssub.s32 %s22, 1
        %s153 = sand.u32 %s35, 1
        %s154 = scalar_lea.sflag [#allocation5], %s153
        %s155 = sand.u32 %s35, 1
        %s156 = smul.addr %s155, 16
        %s157 = scalar_lea.vmem [#allocation4], %s156
        // Predicated region
        $region29: #{wag_forward.1} parent=27 // pred_check
          %p158 = pneg %p48
        $region30: #{wag_forward.1} parent=27 // pred_check_branch
          %160 = sbr.rel (%p158) target = $region32
        $region31: #{wag_forward.1} parent=27 // pred_region
          %161 = dma.done %s154, 256
        $region32: #{wag_forward.1} parent=27 // pred_fallthru
          _
        // Predicated region
        $region33: #{wag_forward.1} parent=27 // pred_check
          %p162 = pneg %p69
        $region34: #{wag_forward.1} parent=27 // pred_check_branch
          %164 = sbr.rel (%p162) target = $region36
        $region35: #{wag_forward.1} parent=27 // pred_region
          %165 = dma.done [#allocation8], 512
        $region36: #{wag_forward.1} parent=27 // pred_fallthru
          _
        %s166 = sand.u32 %s35, 1
        %s167 = scalar_lea.sflag [#allocation5], %s166
        %s168 = sand.u32 %s35, 1
        %s169 = smul.addr %s168, 16
        %s170 = scalar_lea.vmem [#allocation4], %s169
        %p171 = pneg %p48
        %p172 = pneg %p45
        %p173 = pneg %p69
        %p174 = pneg %p66
        %p175 = pneg %p95
        %p176 = pneg %p92
        %s177 = sand.u32 %s82, 1
        %s178 = scalar_lea.sflag [#allocation6], %s177
        %s179 = sand.u32 %s82, 1
        %s180 = smul.addr %s179, 32
        %s181 = scalar_lea.vmem [#allocation9], %s180
        %s182 = smul.u32 2, %s27
        %s183 = smul.u32 2, %s27
        %s184 = sld [smem:[#allocation3]]
        %v185 = vstv %s184
        %s186 = sld [smem:[#allocation3 + $0x1]]
        %v187 = vstv %s186
        %v188 = vmul.f32 %v185, %v187
        %s189 = sld [smem:[#allocation3 + $0x5]]
        %v190 = vstv %s189
        %v191 = vadd.f32 %v188, %v190
        %v192 = vand.u32 2147483647, %v191
        %vm193 = vcmp.le.f32.partialorder %v192, 0.7853982
        %vm194 = vcmp.lt.s32.totalorder %v191, 0
        %v195 = vand.u32 %v191, 2139095040
        %v196 = vshrl.u32 %v195, 23
        %v197 = vsub.s32 %v196, 127
        %v198 = vand.u32 2147483647, %v191
        %v199 = vand.u32 %v198, 8388607
        %v200 = vor.u32 %v199, 8388608
        %v201 = vsub.s32 0, %v200
        %v202 = vadd.s32 %v197, 1
        %vm203 = vcmp.gt.s32.totalorder %v202, 0
        %v204 = vsel %vm203, %v202, 0
        %v205 = vshrl.u32 %v204, 5
        %v206 = vand.u32 %v204, 31
        %v207 = vsub.s32 32, %v206
        %v208 = vshrl.u32 683565275, %v207
        %v209 = vshll.u32 683565275, %v206
        %v210 = vshrl.u32 2475754826, %v207
        %v211 = vor.u32 %v209, %v210
        %v212 = vshll.u32 2475754826, %v206
        %v213 = vshrl.u32 2131351028, %v207
        %v214 = vor.u32 %v212, %v213
        %v215 = vshll.u32 2131351028, %v206
        %v216 = vshrl.u32 2102212464, %v207
        %v217 = vor.u32 %v215, %v216
        %v218 = vshll.u32 2102212464, %v206
        %v219 = vshrl.u32 920167782, %v207
        %v220 = vor.u32 %v218, %v219
        %v221 = vshll.u32 920167782, %v206
        %v222 = vshrl.u32 1326507024, %v207
        %v223 = vor.u32 %v221, %v222
        %vm224 = vcmp.lt.s32.totalorder %v205, 1
        %vm225 = vcmp.lt.s32.totalorder %v205, 2
        %vm226 = vcmp.lt.s32.totalorder %v205, 3
        %vm227 = vcmp.lt.s32.totalorder %v205, 4
        %v228 = vsel %vm224, %v208, %v211
        %v229 = vsel %vm227, %v217, 2102212464
        %v230 = vsel %vm226, %v214, %v229
        %v231 = vsel %vm225, %v228, %v230
        %v232 = vsel %vm224, %v211, %v214
        %v233 = vsel %vm227, %v220, 920167782
        %v234 = vsel %vm226, %v217, %v233
        %v235 = vsel %vm225, %v232, %v234
        %v236 = vsel %vm224, %v214, %v217
        %v237 = vsel %vm227, %v223, 1326507024
        %v238 = vsel %vm226, %v220, %v237
        %v239 = vsel %vm225, %v236, %v238
        %v240 = vshll.u32 %v200, 8
        %v241 = vmul.u32.u64.compose %v240, %v239
        %v242 = vextract.low.u32 %v241
        %v243 = vextract.high.u32 %v241
        %v244 = vmul.u32.u64.compose %v240, %v235
        %v245 = vextract.low.u32 %v244
        %v246 = vextract.high.u32 %v244
        %v247 = vmul.u32 %v240, %v231
        %v248 = vadd.s32 %v243, %v245
        %vm249 = vc.u32 %v243, %v245
        %v250 = vadd.s32 %v246, 1
        %v251 = vsel %vm249, %v250, %v246
        %v252 = vadd.s32 %v247, %v251
        %v253 = vadd.s32 %v252, 536870912
        %v254 = vshrl.u32 %v253, 30
        %v255 = vshll.u32 %v254, 30
        %v256 = vsub.s32 %v252, %v255
        %vm257 = vcmp.lt.s32.totalorder %v256, 0
        %v258 = vsub.s32 0, %v256
        %v259 = vsel %vm257, %v258, %v256
        %v260 = vclz %v259
        %v261 = vsub.s32 %v260, 2
        %vm262 = vcmp.gt.s32.totalorder 0, %v261
        %v263 = vsel %vm262, 0, %v261
        %v264 = vsub.s32 32, %v263
        %v265 = vshll.u32 %v256, %v263
        %v266 = vshrl.u32 %v248, %v264
        %v267 = vor.u32 %v265, %v266
        %v268 = vsub.s32 4294967266, %v263
        %v269 = vadd.s32 %v268, 127
        %v270 = vshll.u32 %v269, 23
        %v271 = vor.u32 4788187, %v270
        %v272 = vand.u32 2147483647, %v271
        %v274 = vcvt.s32.f32 %v267
        %v275 = vmul.f32 %v274, %v272
        %v276 = vxor.u32 %v275, 2147483648
        %v277 = vsel %vm194, %v276, %v275
        %v278 = vsub.s32 4, %v254
        %v279 = vsel %vm194, %v278, %v254
        %v280 = vsel %vm193, %v191, %v277
        %v281 = vsel %vm193, 0, %v279
        %v282 = vcosq.f32.pop %v280
        %v283 = vsinq.f32.pop %v280
        %vm284 = vweird.f32 %v191
        %v285 = vand.u32 %v281, 3
        %vm286 = vcmp.lt.s32.totalorder %v285, 2
        %vm287 = vcmp.eq.s32.totalorder %v285, 0
        %v288 = vxor.u32 %v283, 2147483648
        %v289 = vsel %vm287, %v282, %v288
        %vm290 = vcmp.eq.s32.totalorder %v285, 2
        %v291 = vxor.u32 %v282, 2147483648
        %v292 = vsel %vm290, %v291, %v283
        %v293 = vsel %vm286, %v289, %v292
        %v294 = vsel %vm284, nan, %v293
        %s295 = sld [smem:[#allocation3 + $0x3]]
        %v296 = vstv %s295
        %v297 = vmul.f32 %v185, %v296
        %s298 = sld [smem:[#allocation3 + $0x7]]
        %v299 = vstv %s298
        %v300 = vadd.f32 %v297, %v299
        %v301 = vand.u32 2147483647, %v300
        %vm302 = vcmp.le.f32.partialorder %v301, 0.7853982
        %vm303 = vcmp.lt.s32.totalorder %v300, 0
        %v304 = vand.u32 %v300, 2139095040
        %v305 = vshrl.u32 %v304, 23
        %v306 = vsub.s32 %v305, 127
        %v307 = vand.u32 2147483647, %v300
        %v308 = vand.u32 %v307, 8388607
        %v309 = vor.u32 %v308, 8388608
        %v310 = vsub.s32 0, %v309
        %v311 = vadd.s32 %v306, 1
        %vm312 = vcmp.gt.s32.totalorder %v311, 0
        %v313 = vsel %vm312, %v311, 0
        %v314 = vshrl.u32 %v313, 5
        %v315 = vand.u32 %v313, 31
        %v316 = vsub.s32 32, %v315
        %v317 = vshrl.u32 683565275, %v316
        %v318 = vshll.u32 683565275, %v315
        %v319 = vshrl.u32 2475754826, %v316
        %v320 = vor.u32 %v318, %v319
        %v321 = vshll.u32 2475754826, %v315
        %v322 = vshrl.u32 2131351028, %v316
        %v323 = vor.u32 %v321, %v322
        %v324 = vshll.u32 2131351028, %v315
        %v325 = vshrl.u32 2102212464, %v316
        %v326 = vor.u32 %v324, %v325
        %v327 = vshll.u32 2102212464, %v315
        %v328 = vshrl.u32 920167782, %v316
        %v329 = vor.u32 %v327, %v328
        %v330 = vshll.u32 920167782, %v315
        %v331 = vshrl.u32 1326507024, %v316
        %v332 = vor.u32 %v330, %v331
        %vm333 = vcmp.lt.s32.totalorder %v314, 1
        %vm334 = vcmp.lt.s32.totalorder %v314, 2
        %vm335 = vcmp.lt.s32.totalorder %v314, 3
        %vm336 = vcmp.lt.s32.totalorder %v314, 4
        %v337 = vsel %vm333, %v317, %v320
        %v338 = vsel %vm336, %v326, 2102212464
        %v339 = vsel %vm335, %v323, %v338
        %v340 = vsel %vm334, %v337, %v339
        %v341 = vsel %vm333, %v320, %v323
        %v342 = vsel %vm336, %v329, 920167782
        %v343 = vsel %vm335, %v326, %v342
        %v344 = vsel %vm334, %v341, %v343
        %v345 = vsel %vm333, %v323, %v326
        %v346 = vsel %vm336, %v332, 1326507024
        %v347 = vsel %vm335, %v329, %v346
        %v348 = vsel %vm334, %v345, %v347
        %v349 = vshll.u32 %v309, 8
        %v350 = vmul.u32.u64.compose %v349, %v348
        %v351 = vextract.low.u32 %v350
        %v352 = vextract.high.u32 %v350
        %v353 = vmul.u32.u64.compose %v349, %v344
        %v354 = vextract.low.u32 %v353
        %v355 = vextract.high.u32 %v353
        %v356 = vmul.u32 %v349, %v340
        %v357 = vadd.s32 %v352, %v354
        %vm358 = vc.u32 %v352, %v354
        %v359 = vadd.s32 %v355, 1
        %v360 = vsel %vm358, %v359, %v355
        %v361 = vadd.s32 %v356, %v360
        %v362 = vadd.s32 %v361, 536870912
        %v363 = vshrl.u32 %v362, 30
        %v364 = vshll.u32 %v363, 30
        %v365 = vsub.s32 %v361, %v364
        %vm366 = vcmp.lt.s32.totalorder %v365, 0
        %v367 = vsub.s32 0, %v365
        %v368 = vsel %vm366, %v367, %v365
        %v369 = vclz %v368
        %v370 = vsub.s32 %v369, 2
        %vm371 = vcmp.gt.s32.totalorder 0, %v370
        %v372 = vsel %vm371, 0, %v370
        %v373 = vsub.s32 32, %v372
        %v374 = vshll.u32 %v365, %v372
        %v375 = vshrl.u32 %v357, %v373
        %v376 = vor.u32 %v374, %v375
        %v377 = vsub.s32 4294967266, %v372
        %v378 = vadd.s32 %v377, 127
        %v379 = vshll.u32 %v378, 23
        %v380 = vor.u32 4788187, %v379
        %v381 = vand.u32 2147483647, %v380
        %v383 = vcvt.s32.f32 %v376
        %v384 = vmul.f32 %v383, %v381
        %v385 = vxor.u32 %v384, 2147483648
        %v386 = vsel %vm303, %v385, %v384
        %v387 = vsub.s32 4, %v363
        %v388 = vsel %vm303, %v387, %v363
        %v389 = vsel %vm302, %v300, %v386
        %v390 = vsel %vm302, 0, %v388
        %v391 = vcosq.f32.pop %v389
        %v392 = vsinq.f32.pop %v389
        %vm393 = vweird.f32 %v300
        %v394 = vand.u32 %v390, 3
        %vm395 = vcmp.lt.s32.totalorder %v394, 2
        %vm396 = vcmp.eq.s32.totalorder %v394, 0
        %v397 = vxor.u32 %v392, 2147483648
        %v398 = vsel %vm396, %v391, %v397
        %vm399 = vcmp.eq.s32.totalorder %v394, 2
        %v400 = vxor.u32 %v391, 2147483648
        %v401 = vsel %vm399, %v400, %v392
        %v402 = vsel %vm395, %v398, %v401
        %v403 = vsel %vm393, nan, %v402
        %v404 = vadd.f32 %v294, %v403
        %s405 = sld [smem:[#allocation3 + $0x2]]
        %v406 = vstv %s405
        %v407 = vmul.f32 %v185, %v406
        %s408 = sld [smem:[#allocation3 + $0x6]]
        %v409 = vstv %s408
        %v410 = vadd.f32 %v407, %v409
        %v411 = vand.u32 2147483647, %v410
        %vm412 = vcmp.le.f32.partialorder %v411, 0.7853982
        %vm413 = vcmp.lt.s32.totalorder %v410, 0
        %v414 = vand.u32 %v410, 2139095040
        %v415 = vshrl.u32 %v414, 23
        %v416 = vsub.s32 %v415, 127
        %v417 = vand.u32 2147483647, %v410
        %v418 = vand.u32 %v417, 8388607
        %v419 = vor.u32 %v418, 8388608
        %v420 = vsub.s32 0, %v419
        %v421 = vadd.s32 %v416, 1
        %vm422 = vcmp.gt.s32.totalorder %v421, 0
        %v423 = vsel %vm422, %v421, 0
        %v424 = vshrl.u32 %v423, 5
        %v425 = vand.u32 %v423, 31
        %v426 = vsub.s32 32, %v425
        %v427 = vshrl.u32 683565275, %v426
        %v428 = vshll.u32 683565275, %v425
        %v429 = vshrl.u32 2475754826, %v426
        %v430 = vor.u32 %v428, %v429
        %v431 = vshll.u32 2475754826, %v425
        %v432 = vshrl.u32 2131351028, %v426
        %v433 = vor.u32 %v431, %v432
        %v434 = vshll.u32 2131351028, %v425
        %v435 = vshrl.u32 2102212464, %v426
        %v436 = vor.u32 %v434, %v435
        %v437 = vshll.u32 2102212464, %v425
        %v438 = vshrl.u32 920167782, %v426
        %v439 = vor.u32 %v437, %v438
        %v440 = vshll.u32 920167782, %v425
        %v441 = vshrl.u32 1326507024, %v426
        %v442 = vor.u32 %v440, %v441
        %vm443 = vcmp.lt.s32.totalorder %v424, 1
        %vm444 = vcmp.lt.s32.totalorder %v424, 2
        %vm445 = vcmp.lt.s32.totalorder %v424, 3
        %vm446 = vcmp.lt.s32.totalorder %v424, 4
        %v447 = vsel %vm443, %v427, %v430
        %v448 = vsel %vm446, %v436, 2102212464
        %v449 = vsel %vm445, %v433, %v448
        %v450 = vsel %vm444, %v447, %v449
        %v451 = vsel %vm443, %v430, %v433
        %v452 = vsel %vm446, %v439, 920167782
        %v453 = vsel %vm445, %v436, %v452
        %v454 = vsel %vm444, %v451, %v453
        %v455 = vsel %vm443, %v433, %v436
        %v456 = vsel %vm446, %v442, 1326507024
        %v457 = vsel %vm445, %v439, %v456
        %v458 = vsel %vm444, %v455, %v457
        %v459 = vshll.u32 %v419, 8
        %v460 = vmul.u32.u64.compose %v459, %v458
        %v461 = vextract.low.u32 %v460
        %v462 = vextract.high.u32 %v460
        %v463 = vmul.u32.u64.compose %v459, %v454
        %v464 = vextract.low.u32 %v463
        %v465 = vextract.high.u32 %v463
        %v466 = vmul.u32 %v459, %v450
        %v467 = vadd.s32 %v462, %v464
        %vm468 = vc.u32 %v462, %v464
        %v469 = vadd.s32 %v465, 1
        %v470 = vsel %vm468, %v469, %v465
        %v471 = vadd.s32 %v466, %v470
        %v472 = vadd.s32 %v471, 536870912
        %v473 = vshrl.u32 %v472, 30
        %v474 = vshll.u32 %v473, 30
        %v475 = vsub.s32 %v471, %v474
        %vm476 = vcmp.lt.s32.totalorder %v475, 0
        %v477 = vsub.s32 0, %v475
        %v478 = vsel %vm476, %v477, %v475
        %v479 = vclz %v478
        %v480 = vsub.s32 %v479, 2
        %vm481 = vcmp.gt.s32.totalorder 0, %v480
        %v482 = vsel %vm481, 0, %v480
        %v483 = vsub.s32 32, %v482
        %v484 = vshll.u32 %v475, %v482
        %v485 = vshrl.u32 %v467, %v483
        %v486 = vor.u32 %v484, %v485
        %v487 = vsub.s32 4294967266, %v482
        %v488 = vadd.s32 %v487, 127
        %v489 = vshll.u32 %v488, 23
        %v490 = vor.u32 4788187, %v489
        %v491 = vand.u32 2147483647, %v490
        %v493 = vcvt.s32.f32 %v486
        %v494 = vmul.f32 %v493, %v491
        %v495 = vxor.u32 %v494, 2147483648
        %v496 = vsel %vm413, %v495, %v494
        %v497 = vsub.s32 4, %v473
        %v498 = vsel %vm413, %v497, %v473
        %v499 = vsel %vm412, %v410, %v496
        %v500 = vsel %vm412, 0, %v498
        %v501 = vcosq.f32.pop %v499
        %v502 = vsinq.f32.pop %v499
        %vm503 = vweird.f32 %v410
        %v504 = vadd.s32 %v500, 3
        %v505 = vand.u32 %v504, 3
        %vm506 = vcmp.lt.s32.totalorder %v505, 2
        %vm507 = vcmp.eq.s32.totalorder %v505, 0
        %v508 = vxor.u32 %v502, 2147483648
        %v509 = vsel %vm507, %v501, %v508
        %vm510 = vcmp.eq.s32.totalorder %v505, 2
        %v511 = vxor.u32 %v501, 2147483648
        %v512 = vsel %vm510, %v511, %v502
        %v513 = vsel %vm506, %v509, %v512
        %v514 = vsel %vm503, nan, %v513
        %s515 = sld [smem:[#allocation3 + $0x4]]
        %v516 = vstv %s515
        %v517 = vmul.f32 %v185, %v516
        %s518 = sld [smem:[#allocation3 + $0x8]]
        %v519 = vstv %s518
        %v520 = vadd.f32 %v517, %v519
        %v521 = vand.u32 2147483647, %v520
        %vm522 = vcmp.le.f32.partialorder %v521, 0.7853982
        %vm523 = vcmp.lt.s32.totalorder %v520, 0
        %v524 = vand.u32 %v520, 2139095040
        %v525 = vshrl.u32 %v524, 23
        %v526 = vsub.s32 %v525, 127
        %v527 = vand.u32 2147483647, %v520
        %v528 = vand.u32 %v527, 8388607
        %v529 = vor.u32 %v528, 8388608
        %v530 = vsub.s32 0, %v529
        %v531 = vadd.s32 %v526, 1
        %vm532 = vcmp.gt.s32.totalorder %v531, 0
        %v533 = vsel %vm532, %v531, 0
        %v534 = vshrl.u32 %v533, 5
        %v535 = vand.u32 %v533, 31
        %v536 = vsub.s32 32, %v535
        %v537 = vshrl.u32 683565275, %v536
        %v538 = vshll.u32 683565275, %v535
        %v539 = vshrl.u32 2475754826, %v536
        %v540 = vor.u32 %v538, %v539
        %v541 = vshll.u32 2475754826, %v535
        %v542 = vshrl.u32 2131351028, %v536
        %v543 = vor.u32 %v541, %v542
        %v544 = vshll.u32 2131351028, %v535
        %v545 = vshrl.u32 2102212464, %v536
        %v546 = vor.u32 %v544, %v545
        %v547 = vshll.u32 2102212464, %v535
        %v548 = vshrl.u32 920167782, %v536
        %v549 = vor.u32 %v547, %v548
        %v550 = vshll.u32 920167782, %v535
        %v551 = vshrl.u32 1326507024, %v536
        %v552 = vor.u32 %v550, %v551
        %vm553 = vcmp.lt.s32.totalorder %v534, 1
        %vm554 = vcmp.lt.s32.totalorder %v534, 2
        %vm555 = vcmp.lt.s32.totalorder %v534, 3
        %vm556 = vcmp.lt.s32.totalorder %v534, 4
        %v557 = vsel %vm553, %v537, %v540
        %v558 = vsel %vm556, %v546, 2102212464
        %v559 = vsel %vm555, %v543, %v558
        %v560 = vsel %vm554, %v557, %v559
        %v561 = vsel %vm553, %v540, %v543
        %v562 = vsel %vm556, %v549, 920167782
        %v563 = vsel %vm555, %v546, %v562
        %v564 = vsel %vm554, %v561, %v563
        %v565 = vsel %vm553, %v543, %v546
        %v566 = vsel %vm556, %v552, 1326507024
        %v567 = vsel %vm555, %v549, %v566
        %v568 = vsel %vm554, %v565, %v567
        %v569 = vshll.u32 %v529, 8
        %v570 = vmul.u32.u64.compose %v569, %v568
        %v571 = vextract.low.u32 %v570
        %v572 = vextract.high.u32 %v570
        %v573 = vmul.u32.u64.compose %v569, %v564
        %v574 = vextract.low.u32 %v573
        %v575 = vextract.high.u32 %v573
        %v576 = vmul.u32 %v569, %v560
        %v577 = vadd.s32 %v572, %v574
        %vm578 = vc.u32 %v572, %v574
        %v579 = vadd.s32 %v575, 1
        %v580 = vsel %vm578, %v579, %v575
        %v581 = vadd.s32 %v576, %v580
        %v582 = vadd.s32 %v581, 536870912
        %v583 = vshrl.u32 %v582, 30
        %v584 = vshll.u32 %v583, 30
        %v585 = vsub.s32 %v581, %v584
        %vm586 = vcmp.lt.s32.totalorder %v585, 0
        %v587 = vsub.s32 0, %v585
        %v588 = vsel %vm586, %v587, %v585
        %v589 = vclz %v588
        %v590 = vsub.s32 %v589, 2
        %vm591 = vcmp.gt.s32.totalorder 0, %v590
        %v592 = vsel %vm591, 0, %v590
        %v593 = vsub.s32 32, %v592
        %v594 = vshll.u32 %v585, %v592
        %v595 = vshrl.u32 %v577, %v593
        %v596 = vor.u32 %v594, %v595
        %v597 = vsub.s32 4294967266, %v592
        %v598 = vadd.s32 %v597, 127
        %v599 = vshll.u32 %v598, 23
        %v600 = vor.u32 4788187, %v599
        %v601 = vand.u32 2147483647, %v600
        %v603 = vcvt.s32.f32 %v596
        %v604 = vmul.f32 %v603, %v601
        %v605 = vxor.u32 %v604, 2147483648
        %v606 = vsel %vm523, %v605, %v604
        %v607 = vsub.s32 4, %v583
        %v608 = vsel %vm523, %v607, %v583
        %v609 = vsel %vm522, %v520, %v606
        %v610 = vsel %vm522, 0, %v608
        %v611 = vcosq.f32.pop %v609
        %v612 = vsinq.f32.pop %v609
        %vm613 = vweird.f32 %v520
        %v614 = vadd.s32 %v610, 3
        %v615 = vand.u32 %v614, 3
        %vm616 = vcmp.lt.s32.totalorder %v615, 2
        %vm617 = vcmp.eq.s32.totalorder %v615, 0
        %v618 = vxor.u32 %v612, 2147483648
        %v619 = vsel %vm617, %v611, %v618
        %vm620 = vcmp.eq.s32.totalorder %v615, 2
        %v621 = vxor.u32 %v611, 2147483648
        %v622 = vsel %vm620, %v621, %v612
        %v623 = vsel %vm616, %v619, %v622
        %v624 = vsel %vm613, nan, %v623
        %v625 = vadd.f32 %v514, %v624
        %v626 = vld [vmem:[#allocation7] sm:$0xff]
        %v627 = vld [vmem:[#allocation7 + $0x8] sm:$0xff]
        %v628 = vld [vmem:[#allocation7 + $0x10] sm:$0xff]
        %v629 = vld [vmem:[#allocation7 + $0x18] sm:$0xff]
        %v630 = vmul.f32 %v626, %v404
        %v631 = vmul.f32 %v627, %v404
        %v632 = vmul.f32 %v628, %v404
        %v633 = vmul.f32 %v629, %v404
        %v634 = vmul.f32 %v626, %v625
        %v635 = vmul.f32 %v627, %v625
        %v636 = vmul.f32 %v628, %v625
        %v637 = vmul.f32 %v629, %v625
        %642 = vrot.lane.b32.xlu0 %v634, 96
        %v643 = vpop.permute.xlu0 %642
        %644 = vrot.lane.b32.xlu0 %v635, 96
        %v645 = vpop.permute.xlu0 %644
        %646 = vrot.lane.b32.xlu0 %v636, 96
        %v647 = vpop.permute.xlu0 %646
        %648 = vrot.lane.b32.xlu0 %v637, 96
        %v649 = vpop.permute.xlu0 %648
        %v654 = vadd.f32 %v630, %v643
        %v655 = vadd.f32 %v631, %v645
        %v656 = vadd.f32 %v632, %v647
        %v657 = vadd.f32 %v633, %v649
        %658 = vrot.lane.b32.xlu0 %v634, 127
        %v659 = vpop.permute.xlu0 %658
        %660 = vrot.lane.b32.xlu0 %v635, 127
        %v661 = vpop.permute.xlu0 %660
        %662 = vrot.lane.b32.xlu0 %v636, 127
        %v663 = vpop.permute.xlu0 %662
        %664 = vrot.lane.b32.xlu0 %v637, 127
        %v665 = vpop.permute.xlu0 %664
        %v670 = vadd.f32 %v630, %v659
        %v671 = vadd.f32 %v631, %v661
        %v672 = vadd.f32 %v632, %v663
        %v673 = vadd.f32 %v633, %v665
        %v674 = vld [vmem:[%s157] sm:$0x1f]
        %v675 = vld [vmem:[%s157 + $0x8] sm:$0x1f]
        %677 = vset.pattern.permute.xlu0 64
        %678 = vperm.xlu0 %677, %v626
        %v679 = vpop.permute.xlu0 %678
        %682 = vset.pattern.permute.xlu0 64
        %683 = vperm.xlu0 %682, %v627
        %v684 = vpop.permute.xlu0 %683
        %687 = vset.pattern.permute.xlu0 64
        %688 = vperm.xlu0 %687, %v628
        %v689 = vpop.permute.xlu0 %688
        %692 = vset.pattern.permute.xlu0 64
        %693 = vperm.xlu0 %692, %v629
        %v694 = vpop.permute.xlu0 %693
        %v696 = vlaneseq
        %v697 = vshrl.u32 %v696, 7
        %v698 = vsub.s32 2, %v697
        %v699 = vrot.slane %v674, %v698
        %v700 = vlaneseq
        %v701 = vshrl.u32 %v700, 7
        %v702 = vsub.s32 2, %v701
        %v703 = vrot.slane %v675, %v702
        %v704 = vmul.f32 %v679, %v699
        %v705 = vmul.f32 %v679, %v703
        %v706 = vmul.f32 %v684, %v699
        %v707 = vmul.f32 %v684, %v703
        %v708 = vmul.f32 %v689, %v699
        %v709 = vmul.f32 %v689, %v703
        %v710 = vmul.f32 %v694, %v699
        %v711 = vmul.f32 %v694, %v703
        %712 = vset.pattern.permute.xlu0 67
        %713 = vperm.xlu0 %712, %v626
        %v714 = vpop.permute.xlu0 %713
        %716 = vset.pattern.permute.xlu0 67
        %717 = vperm.xlu0 %716, %v627
        %v718 = vpop.permute.xlu0 %717
        %720 = vset.pattern.permute.xlu0 67
        %721 = vperm.xlu0 %720, %v628
        %v722 = vpop.permute.xlu0 %721
        %724 = vset.pattern.permute.xlu0 67
        %725 = vperm.xlu0 %724, %v629
        %v726 = vpop.permute.xlu0 %725
        %v728 = vadd.f32 %v714, %v704
        %v729 = vadd.f32 %v714, %v705
        %v730 = vadd.f32 %v718, %v706
        %v731 = vadd.f32 %v718, %v707
        %v732 = vadd.f32 %v722, %v708
        %v733 = vadd.f32 %v722, %v709
        %v734 = vadd.f32 %v726, %v710
        %v735 = vadd.f32 %v726, %v711
        %736 = vset.pattern.permute.xlu0 65
        %737 = vperm.xlu0 %736, %v626
        %v738 = vpop.permute.xlu0 %737
        %740 = vset.pattern.permute.xlu0 65
        %741 = vperm.xlu0 %740, %v627
        %v742 = vpop.permute.xlu0 %741
        %744 = vset.pattern.permute.xlu0 65
        %745 = vperm.xlu0 %744, %v628
        %v746 = vpop.permute.xlu0 %745
        %748 = vset.pattern.permute.xlu0 65
        %749 = vperm.xlu0 %748, %v629
        %v750 = vpop.permute.xlu0 %749
        %v752 = vlaneseq
        %v753 = vshrl.u32 %v752, 7
        %v754 = vsub.s32 3, %v753
        %v755 = vrot.slane %v674, %v754
        %v756 = vlaneseq
        %v757 = vshrl.u32 %v756, 7
        %v758 = vsub.s32 3, %v757
        %v759 = vrot.slane %v675, %v758
        %v760 = vmul.f32 %v738, %v755
        %v761 = vmul.f32 %v738, %v759
        %v762 = vmul.f32 %v742, %v755
        %v763 = vmul.f32 %v742, %v759
        %v764 = vmul.f32 %v746, %v755
        %v765 = vmul.f32 %v746, %v759
        %v766 = vmul.f32 %v750, %v755
        %v767 = vmul.f32 %v750, %v759
        %v768 = vadd.f32 %v728, %v760
        %v769 = vadd.f32 %v729, %v761
        %v770 = vadd.f32 %v730, %v762
        %v771 = vadd.f32 %v731, %v763
        %v772 = vadd.f32 %v732, %v764
        %v773 = vadd.f32 %v733, %v765
        %v774 = vadd.f32 %v734, %v766
        %v775 = vadd.f32 %v735, %v767
        %776 = vset.pattern.permute.xlu0 66
        %777 = vperm.xlu0 %776, %v626
        %v778 = vpop.permute.xlu0 %777
        %780 = vset.pattern.permute.xlu0 66
        %781 = vperm.xlu0 %780, %v627
        %v782 = vpop.permute.xlu0 %781
        %784 = vset.pattern.permute.xlu0 66
        %785 = vperm.xlu0 %784, %v628
        %v786 = vpop.permute.xlu0 %785
        %788 = vset.pattern.permute.xlu0 66
        %789 = vperm.xlu0 %788, %v629
        %v790 = vpop.permute.xlu0 %789
        %v792 = vlaneseq
        %v793 = vshrl.u32 %v792, 7
        %v794 = vsub.s32 4, %v793
        %v795 = vrot.slane %v674, %v794
        %v796 = vlaneseq
        %v797 = vshrl.u32 %v796, 7
        %v798 = vsub.s32 4, %v797
        %v799 = vrot.slane %v675, %v798
        %v800 = vmul.f32 %v778, %v795
        %v801 = vmul.f32 %v778, %v799
        %v802 = vmul.f32 %v782, %v795
        %v803 = vmul.f32 %v782, %v799
        %v804 = vmul.f32 %v786, %v795
        %v805 = vmul.f32 %v786, %v799
        %v806 = vmul.f32 %v790, %v795
        %v807 = vmul.f32 %v790, %v799
        %v808 = vadd.f32 %v768, %v800
        %v809 = vadd.f32 %v769, %v801
        %v810 = vadd.f32 %v770, %v802
        %v811 = vadd.f32 %v771, %v803
        %v812 = vadd.f32 %v772, %v804
        %v813 = vadd.f32 %v773, %v805
        %v814 = vadd.f32 %v774, %v806
        %v815 = vadd.f32 %v775, %v807
        %v816 = vtanh.pop %v808
        %v817 = vtanh.pop %v809
        %v818 = vtanh.pop %v810
        %v819 = vtanh.pop %v811
        %v820 = vtanh.pop %v812
        %v821 = vtanh.pop %v813
        %v822 = vtanh.pop %v814
        %v823 = vtanh.pop %v815
        %825 = vset.pattern.permute.xlu0 68
        %826 = vperm.xlu0 %825, %v670
        %v827 = vpop.permute.xlu0 %826
        %830 = vset.pattern.permute.xlu0 68
        %831 = vperm.xlu0 %830, %v671
        %v832 = vpop.permute.xlu0 %831
        %835 = vset.pattern.permute.xlu0 68
        %836 = vperm.xlu0 %835, %v672
        %v837 = vpop.permute.xlu0 %836
        %840 = vset.pattern.permute.xlu0 68
        %841 = vperm.xlu0 %840, %v673
        %v842 = vpop.permute.xlu0 %841
        %vm844 = vcmask 261120
        %v846 = vsel %vm844, %v654, 0
        %v849 = vsel %vm844, %v655, 0
        %v852 = vsel %vm844, %v656, 0
        %v855 = vsel %vm844, %v657, 0
        %857 = vmatprep.subr.mxu0 %v817
        %858 = vmatpush1.msra.mxu0 %v816
        %859 = vmatprep.subr.mxu0 %v819
        %860 = vmatpush1.msra.mxu0 %v818
        %861 = vmatprep.subr.mxu0 %v821
        %862 = vmatpush1.msra.mxu0 %v820
        %863 = vmatprep.subr.mxu0 %v823
        %864 = vmatpush1.msra.mxu0 %v822
        %865 = vmatprep.subr.mxu0 0.0
        %866 = vmatpush1.msra.mxu0 0.0
        %867 = vmatprep.subr.mxu0 0.0
        %868 = vmatpush1.msra.mxu0 0.0
        %869 = vmatprep.subr.mxu0 0.0
        %870 = vmatpush1.msra.mxu0 0.0
        %871 = vmatprep.subr.mxu0 0.0
        %872 = vmatpush1.msra.mxu0 0.0
        %873 = vmatprep.subr.mxu0 0.0
        %874 = vmatpush1.msra.mxu0 0.0
        %875 = vmatprep.subr.mxu0 0.0
        %876 = vmatpush1.msra.mxu0 0.0
        %877 = vmatprep.subr.mxu0 0.0
        %878 = vmatpush1.msra.mxu0 0.0
        %879 = vmatprep.subr.mxu0 0.0
        %880 = vmatpush1.msra.mxu0 0.0
        %881 = vmatprep.subr.mxu0 0.0
        %882 = vmatpush1.msra.mxu0 0.0
        %883 = vmatprep.subr.mxu0 0.0
        %884 = vmatpush1.msra.mxu0 0.0
        %885 = vmatprep.subr.mxu0 0.0
        %886 = vmatpush1.msra.mxu0 0.0
        %887 = vmatprep.subr.mxu0 0.0
        %888 = vmatpush1.msra.mxu0 0.0
        %889 = vmatprep.subr.mxu0 0.0
        %890 = vmatpush1.msra.mxu0 0.0
        %891 = vmatprep.subr.mxu0 0.0
        %892 = vmatpush1.msra.mxu0 0.0
        %893 = vmatprep.subr.mxu0 0.0
        %894 = vmatpush1.msra.mxu0 0.0
        %895 = vmatprep.subr.mxu0 0.0
        %896 = vmatpush1.msra.mxu0 0.0
        %897 = vmatprep.subr.mxu0 0.0
        %898 = vmatpush1.msra.mxu0 0.0
        %899 = vmatprep.subr.mxu0 0.0
        %900 = vmatpush1.msra.mxu0 0.0
        %901 = vmatprep.subr.mxu0 0.0
        %902 = vmatpush1.msra.mxu0 0.0
        %903 = vmatprep.subr.mxu0 0.0
        %904 = vmatpush1.msra.mxu0 0.0
        %905 = vmatprep.subr.mxu0 0.0
        %906 = vmatpush1.msra.mxu0 0.0
        %907 = vmatprep.subr.mxu0 0.0
        %908 = vmatpush1.msra.mxu0 0.0
        %909 = vmatprep.subr.mxu0 0.0
        %910 = vmatpush1.msra.mxu0 0.0
        %911 = vmatprep.subr.mxu0 0.0
        %912 = vmatpush1.msra.mxu0 0.0
        %913 = vmatprep.subr.mxu0 0.0
        %914 = vmatpush1.msra.mxu0 0.0
        %915 = vmatprep.subr.mxu0 0.0
        %916 = vmatpush1.msra.mxu0 0.0
        %917 = vmatprep.subr.mxu0 0.0
        %918 = vmatpush1.msra.mxu0 0.0
        %919 = vmatprep.subr.mxu0 0.0
        %920 = vmatpush1.msra.mxu0 0.0
        %921 = vmatprep.mubr.f32.mxu0 0.0
        %922 = vmatmul.mubr.f32.gmra.mrb[0].mxu0 %v846
        %v923 = vpop.f32.mrb[0].mxu0
        %v924 = vadd.f32 %v827, %v923
        %v925 = vpop.f32.mrb[0].mxu0
        %v926 = vadd.f32 %v827, %v925
        %927 = vmatprep.mubr.f32.mxu0 0.0
        %928 = vmatmul.mubr.f32.gmra.mrb[0].mxu0 %v849
        %v929 = vpop.f32.mrb[0].mxu0
        %v930 = vadd.f32 %v832, %v929
        %v931 = vpop.f32.mrb[0].mxu0
        %v932 = vadd.f32 %v832, %v931
        %933 = vmatprep.mubr.f32.mxu0 0.0
        %934 = vmatmul.mubr.f32.gmra.mrb[0].mxu0 %v852
        %v935 = vpop.f32.mrb[0].mxu0
        %v936 = vadd.f32 %v837, %v935
        %v937 = vpop.f32.mrb[0].mxu0
        %v938 = vadd.f32 %v837, %v937
        %939 = vmatprep.mubr.f32.mxu0 0.0
        %940 = vmatmul.mubr.f32.gmra.mrb[0].mxu0 %v855
        %v941 = vpop.f32.mrb[0].mxu0
        %v942 = vadd.f32 %v842, %v941
        %v943 = vpop.f32.mrb[0].mxu0
        %v944 = vadd.f32 %v842, %v943
        %945 = vdwg.mxu0
        %v946 = vlaneseq
        %v947 = vshrl.u32 %v946, 7
        %v948 = vsub.s32 0, %v947
        %v949 = vrot.slane %v674, %v948
        %v950 = vlaneseq
        %v951 = vshrl.u32 %v950, 7
        %v952 = vsub.s32 0, %v951
        %v953 = vrot.slane %v675, %v952
        %v954 = vmul.f32 %v949, %v924
        %v955 = vmul.f32 %v953, %v926
        %v956 = vmul.f32 %v949, %v930
        %v957 = vmul.f32 %v953, %v932
        %v958 = vadd.f32 %v954, %v936
        %v959 = vadd.f32 %v955, %v938
        %v960 = vadd.f32 %v956, %v942
        %v961 = vadd.f32 %v957, %v944
        %962 = vst [vmem:[%s181] sm:$0xff] %v958
        %963 = vst [vmem:[%s181 + $0x8] sm:$0xff] %v959
        %964 = vst [vmem:[%s181 + $0x10] sm:$0xff] %v960
        %965 = vst [vmem:[%s181 + $0x18] sm:$0xff] %v961
        %s966 = sand.u32 %s82, 1
        %s967 = scalar_lea.sflag [#allocation6], %s966
        %s968 = sand.u32 %s82, 1
        %s969 = smul.addr %s968, 32
        %s970 = scalar_lea.vmem [#allocation9], %s969
        // Predicated region
        $region37: #{wag_forward.1} parent=27 // pred_check
          %p971 = pneg %p92
        $region38: #{wag_forward.1} parent=27 // pred_check_branch
          %973 = sbr.rel (%p971) target = $region40
        $region39: #{wag_forward.1} parent=27 // pred_region
          %s974 = smul.u32 2, %s27
          %s976 = ssub.s32 512, 512
          %977 = vsyncadd %s967, %s976
          %s978 = smul.addr %s974, 128
          %s979 = scalar_lea.hbm %s3, %s978
          %s980 = sshll.u32 %s970, 4
          %s981 = int_to_ptr.vmem [resolvable:$true] %s980
          %986 = dma.vmem_to_hbm [thread:$0]  %s981, 512, %s979, %s967, 256, 1024, 16
        $region40: #{wag_forward.1} parent=27 // pred_fallthru
          _
      $region28: #{wag_forward.1} parent=5 // pred_fallthru
        _
      %p987 = scmp.le.s32.totalorder 2, %s22
      // Predicated region
      $region41: #{wag_forward.1} parent=5 // pred_check
        %p988 = pneg %p987
      $region42: #{wag_forward.1} parent=5 // pred_check_branch
        %990 = sbr.rel (%p988) target = $region44
      $region43: #{wag_forward.1} parent=5 // pred_region
        %s991 = ssub.s32 %s22, 2
        // Predicated region
        $region45: #{wag_forward.1} parent=43 // pred_check
          %p992 = pneg %p98
        $region46: #{wag_forward.1} parent=43 // pred_check_branch
          %994 = sbr.rel (%p992) target = $region48
        $region47: #{wag_forward.1} parent=43 // pred_region
          %s995 = sand.u32 %s83, 1
          %s996 = scalar_lea.sflag [#allocation6], %s995
          %s997 = sand.u32 %s83, 1
          %s998 = smul.addr %s997, 32
          %s999 = scalar_lea.vmem [#allocation9], %s998
          %1000 = dma.done %s996, 512
        $region48: #{wag_forward.1} parent=43 // pred_fallthru
          _
      $region44: #{wag_forward.1} parent=5 // pred_fallthru
        _
    $region6: #{wag_forward.1} parent=1 // loop_footer
      %s26 = sadd.s32 1, %s22
    $region7: #{wag_forward.1} parent=1 // loop_footer_branch
      %21 = sbr.rel target = $region3
    $region8: #{wag_forward.1} parent=1 // loop_exit
      _
    %1001 = vsyncpa [#allocation5], 1
    %s1002 = scalar_lea.sflag [#allocation5], 1
    %1003 = vsyncpa %s1002, 1
    %1004 = vsyncpa [#allocation8], 1
    %1005 = vsyncpa [#allocation6], 1
    %s1006 = scalar_lea.sflag [#allocation6], 1
    %1007 = vsyncpa %s1006, 1

</llo_original>
